<compile_context>
chip_gen: v7x
topology: tpu7x:2x2x1
jax: 0.10.0
libtpu: 0.0.40
codegen_flags: <defaults>
</compile_context>

<pallas_src>
import math
import functools

import jax
import jax.numpy as jnp
from jax.experimental import pallas as pl
from jax.experimental.pallas import tpu as pltpu


def make_pe_table(d_model: int, max_length: int = 60) -> jnp.ndarray:
    """Deterministic buffer setup (matches the PyTorch __init__)."""
    position = jnp.arange(0, max_length, dtype=jnp.float32)[:, None]           # (L, 1)
    div_term = jnp.exp(jnp.arange(0, d_model, 2, dtype=jnp.float32)
                       * (-math.log(10000.0) / d_model))                       # (D/2,)
    vec = position * div_term                                                  # (L, D/2)
    # interleave: pe[:, 0::2] = sin(vec), pe[:, 1::2] = cos(vec)
    pe = jnp.stack([jnp.sin(vec), jnp.cos(vec)], axis=-1).reshape(max_length, d_model)
    return pe.astype(jnp.float32)


def _pick_tile_s(S: int, D: int, itemsize: int, target_bytes: int = 2 * 1024 * 1024) -> int:
    """Largest row-tile that keeps one x block ~<= 2 MiB and obeys the (8,128) rule."""
    if S <= 8:
        return S                                   # full extent is always legal
    max_rows = max(8, target_bytes // max(1, D * itemsize))
    ts = min(S, max_rows)
    ts = max(8, (ts // 8) * 8)                     # multiple of 8 sublanes
    return S if ts >= S else ts


def _pos_enc_kernel(seed_ref, x_ref, pe_ref, o_ref, *, dropout_p, training, S, TS):
    # x_ref: (1, TS, D) VMEM | pe_ref: (TS, D) VMEM | seed_ref: (1,) SMEM int32
    x = x_ref[...]
    pe = pe_ref[...]
    y = x + pe[None, :, :]                         # broadcast add over batch

    if training and dropout_p > 0.0:
        b = pl.program_id(0)
        j = pl.program_id(1)
        D = x.shape[-1]
        # Global flat element index for this tile (distinct per grid block, so the
        # dropout mask never repeats across tiles).
        row = jax.lax.broadcasted_iota(jnp.uint32, (TS, D), 0)
        col = jax.lax.broadcasted_iota(jnp.uint32, (TS, D), 1)
        base = ((b * S + j * TS) * D).astype(jnp.uint32)
        idx = base + row * jnp.uint32(D) + col
        # Stateless counter hash (xxhash-style avalanche), seeded from the scalar.
        h = idx ^ (seed_ref[0].astype(jnp.uint32) * jnp.uint32(0x9E3779B9))
        h = h ^ (h >> 16)
        h = h * jnp.uint32(0x7FEB352D)
        h = h ^ (h >> 15)
        h = h * jnp.uint32(0x846CA68B)
        h = h ^ (h >> 16)
        # Inverted dropout: keep with prob (1-p) via a single integer threshold compare.
        threshold = jnp.uint32(min(int(round(dropout_p * 2**32)), 2**32 - 1))
        keep = h >= threshold                      # (TS, D) bool
        scale = jnp.asarray(1.0 / (1.0 - dropout_p), dtype=y.dtype)
        y = jnp.where(keep[None, :, :], y * scale, jnp.zeros((), y.dtype))

    o_ref[...] = y.astype(o_ref.dtype)


def position_encoding(x, pe_table, *, dropout_p=0.1, training=True, seed=0):
    """x: (B, S, D). Returns dropout(x + pe[:S]) with inverted-dropout scaling."""
    B, S, D = x.shape
    pe_slice = pe_table[:S].astype(x.dtype)        # (S, D)
    seed_arr = jnp.asarray([seed], dtype=jnp.int32)

    TS = _pick_tile_s(S, D, jnp.dtype(x.dtype).itemsize)
    grid = (B, pl.cdiv(S, TS))

    kernel = functools.partial(
        _pos_enc_kernel, dropout_p=float(dropout_p), training=bool(training), S=S, TS=TS
    )

    return pl.pallas_call(
        kernel,
        out_shape=jax.ShapeDtypeStruct((B, S, D), x.dtype),
        grid_spec=pltpu.PrefetchScalarGridSpec(
            num_scalar_prefetch=1,                 # seed lives in SMEM
            grid=grid,
            in_specs=[
                pl.BlockSpec((1, TS, D), lambda b, j, seed: (b, j, 0)),   # x
                pl.BlockSpec((TS, D),     lambda b, j, seed: (j, 0)),     # pe
            ],
            out_specs=pl.BlockSpec((1, TS, D), lambda b, j, seed: (b, j, 0)),
        ),
        compiler_params=pltpu.CompilerParams(
            dimension_semantics=("parallel", "parallel"),
        ),
    )(seed_arr, x, pe_slice)


if __name__ == "__main__":
    # Small shapes consistent with the module: batch=2, seq=8, d_model=32.
    B, S, D = 2, 8, 32
    dropout_p = 0.1
    key = jax.random.PRNGKey(0)
    x = jax.random.normal(key, (B, S, D), dtype=jnp.float32)

    pe_table = make_pe_table(d_model=D, max_length=60)

    # Training-mode forward (stochastic dropout, deterministic via fixed seed).
    out_train = position_encoding(x, pe_table, dropout_p=dropout_p, training=True, seed=0)
    out_train = jax.block_until_ready(out_train)

    # Eval-mode forward (dropout is identity) — check against pure-JAX reference.
    out_eval = position_encoding(x, pe_table, dropout_p=dropout_p, training=False)
    out_eval = jax.block_until_ready(out_eval)

    ref = x + pe_table[None, :S, :]
    assert out_eval.shape == (B, S, D) and out_train.shape == (B, S, D)
    assert jnp.allclose(out_eval, ref, atol=1e-6, rtol=1e-6)

    # Training output: every nonzero element must equal (x + pe) / (1 - p).
    scaled = ref / (1.0 - dropout_p)
    kept = out_train != 0.0
    assert jnp.allclose(jnp.where(kept, out_train - scaled, 0.0), 0.0, atol=1e-5)

    print("KERNEL_OK")
</pallas_src>

<mosaic_0001>
module attributes {stable_mosaic.version = 11 : i64} {
  func.func @_pos_enc_kernel(%arg0: i32, %arg1: i32, %arg2: memref<1xi32, #tpu.memory_space<smem>>, %arg3: memref<1x8x32xf32, #tpu.memory_space<vmem>>, %arg4: memref<8x32xf32, #tpu.memory_space<vmem>>, %arg5: memref<1x8x32xf32, #tpu.memory_space<vmem>>) attributes {dimension_semantics = [#tpu.dimension_semantics<parallel>, #tpu.dimension_semantics<parallel>], iteration_bounds = array<i64: 2, 1>, scalar_prefetch = 1 : i64, scratch_operands = 0 : i64, tpu.core_type = #tpu.core_type<tc>, window_params = [{transform_indices = @transform_0, window_bounds = array<i64: 1, 8, 32>}, {transform_indices = @transform_1, window_bounds = array<i64: 8, 32>}, {transform_indices = @transform_2, window_bounds = array<i64: 1, 8, 32>}]} {
    %c0 = arith.constant 0 : index
    %c0_0 = arith.constant 0 : index
    %c0_1 = arith.constant 0 : index
    %0 = vector.load %arg3[%c0, %c0_0, %c0_1] : memref<1x8x32xf32, #tpu.memory_space<vmem>>, vector<1x8x32xf32>
    %c0_2 = arith.constant 0 : index
    %c0_3 = arith.constant 0 : index
    %1 = vector.load %arg4[%c0_2, %c0_3] : memref<8x32xf32, #tpu.memory_space<vmem>>, vector<8x32xf32>
    %2 = vector.shape_cast %1 : vector<8x32xf32> to vector<1x8x32xf32>
    %3 = arith.addf %0, %2 : vector<1x8x32xf32>
    %4 = tpu.iota {dimensions = array<i32: 0>} : vector<8x32xi32>
    %5 = tpu.iota {dimensions = array<i32: 1>} : vector<8x32xi32>
    %c8_i32 = arith.constant 8 : i32
    %6 = arith.muli %arg0, %c8_i32 : i32
    %c8_i32_4 = arith.constant 8 : i32
    %7 = arith.muli %arg1, %c8_i32_4 : i32
    %8 = arith.addi %6, %7 : i32
    %c32_i32 = arith.constant 32 : i32
    %9 = arith.muli %8, %c32_i32 : i32
    %c32_i32_5 = arith.constant 32 : i32
    %10 = vector.broadcast %c32_i32_5 : i32 to vector<8x32xi32>
    %11 = arith.muli %4, %10 : vector<8x32xi32>
    %12 = vector.broadcast %9 : i32 to vector<8x32xi32>
    %13 = arith.addi %12, %11 : vector<8x32xi32>
    %14 = arith.addi %13, %5 : vector<8x32xi32>
    %c0_6 = arith.constant 0 : index
    %15 = memref.load %arg2[%c0_6] : memref<1xi32, #tpu.memory_space<smem>>
    %c-1640531527_i32 = arith.constant -1640531527 : i32
    %16 = arith.muli %15, %c-1640531527_i32 : i32
    %17 = vector.broadcast %16 : i32 to vector<8x32xi32>
    %18 = arith.xori %14, %17 : vector<8x32xi32>
    %c16_i32 = arith.constant 16 : i32
    %19 = vector.broadcast %c16_i32 : i32 to vector<8x32xi32>
    %20 = arith.shrui %18, %19 : vector<8x32xi32>
    %21 = arith.xori %18, %20 : vector<8x32xi32>
    %c2146121005_i32 = arith.constant 2146121005 : i32
    %22 = vector.broadcast %c2146121005_i32 : i32 to vector<8x32xi32>
    %23 = arith.muli %21, %22 : vector<8x32xi32>
    %c15_i32 = arith.constant 15 : i32
    %24 = vector.broadcast %c15_i32 : i32 to vector<8x32xi32>
    %25 = arith.shrui %23, %24 : vector<8x32xi32>
    %26 = arith.xori %23, %25 : vector<8x32xi32>
    %c-2073254261_i32 = arith.constant -2073254261 : i32
    %27 = vector.broadcast %c-2073254261_i32 : i32 to vector<8x32xi32>
    %28 = arith.muli %26, %27 : vector<8x32xi32>
    %c16_i32_7 = arith.constant 16 : i32
    %29 = vector.broadcast %c16_i32_7 : i32 to vector<8x32xi32>
    %30 = arith.shrui %28, %29 : vector<8x32xi32>
    %31 = arith.xori %28, %30 : vector<8x32xi32>
    %c429496730_i32 = arith.constant 429496730 : i32
    %32 = vector.broadcast %c429496730_i32 : i32 to vector<8x32xi32>
    %33 = arith.cmpi uge, %31, %32 : vector<8x32xi32>
    %34 = vector.shape_cast %33 : vector<8x32xi1> to vector<1x8x32xi1>
    %cst = arith.constant 1.11111116 : f32
    %35 = vector.broadcast %cst : f32 to vector<1x8x32xf32>
    %36 = arith.mulf %3, %35 : vector<1x8x32xf32>
    %cst_8 = arith.constant 0.000000e+00 : f32
    %37 = vector.broadcast %cst_8 : f32 to vector<1x8x32xf32>
    %38 = arith.select %34, %36, %37 : vector<1x8x32xi1>, vector<1x8x32xf32>
    %c0_9 = arith.constant 0 : index
    %c0_10 = arith.constant 0 : index
    %c0_11 = arith.constant 0 : index
    %39 = vector.load %arg5[%c0_9, %c0_10, %c0_11] : memref<1x8x32xf32, #tpu.memory_space<vmem>>, vector<1x8x32xf32>
    tpu.vector_store %arg5[%c0_9, %c0_10, %c0_11], %38 {strides = array<i32>} : memref<1x8x32xf32, #tpu.memory_space<vmem>>, vector<1x8x32xf32>,
    return
  }
  func.func @transform_0(%arg0: i32, %arg1: i32, %arg2: memref<1xi32, #tpu.memory_space<smem>>) -> (i32, i32, i32) {
    %c0_i32 = arith.constant 0 : i32
    %c0_i32_0 = arith.constant 0 : i32
    return %arg0, %arg1, %c0_i32 : i32, i32, i32
  }
  func.func @transform_1(%arg0: i32, %arg1: i32, %arg2: memref<1xi32, #tpu.memory_space<smem>>) -> (i32, i32) {
    %c0_i32 = arith.constant 0 : i32
    %c0_i32_0 = arith.constant 0 : i32
    return %arg1, %c0_i32 : i32, i32
  }
  func.func @transform_2(%arg0: i32, %arg1: i32, %arg2: memref<1xi32, #tpu.memory_space<smem>>) -> (i32, i32, i32) {
    %c0_i32 = arith.constant 0 : i32
    %c0_i32_0 = arith.constant 0 : i32
    return %arg0, %arg1, %c0_i32 : i32, i32, i32
  }
}

</mosaic_0001>

<llo_original>
// kernel: tpu_custom_call.1
$region0: #{tpu_custom_call.1}
  #allocation0 [shape = 'u32[]', space=smem, size = 0x4, offset = 0x4, fixed_abs, tag = 'smem constant byte address 0x4 - core index']
  #allocation1 [shape = 'u32[144,128]{1,0:T(1,128)}', space=vmem, size = 0x12000, scoped, tag = 'internal scratch']
  #allocation2 [shape = 's32[1]{0}', space=sflag, size = 0x4, scoped, tag = 'scoped memory for tpu_custom_call.1']
  #allocation3 [shape = 's32[1]{0:T(128)S(6)}', space=smem, size = 0x200, scoped, tag = 'prefetched SMEM operand 0']
  %s0 = inlined_call_operand.<no memory space> [shape: s32[1], index: 0, kind: input, shape index: {}]
  %s1 = inlined_call_operand.hbm [shape: f32[2,8,32], index: 1, kind: input, shape index: {}]
  %s2 = inlined_call_operand.hbm [shape: f32[8,32], index: 2, kind: input, shape index: {}]
  %s3 = inlined_call_operand.hbm [shape: f32[2,8,32], index: 3, kind: output, shape index: {}]
  %s4 = sld [smem:[#allocation0]]
  $region49: #{tpu_custom_call.1} parent=0
    _
  %s6 = ssub.s32 1, %s4
  %s7 = scalar_select 0, %s6, %s4
  %8 = sst [smem:[#allocation3]] %s0
  $region1: #{tpu_custom_call.1} parent=0
    #allocation4 [shape = 'u8[8192]{0}', space=vmem, size = 0x2000, scoped, tag = 'input window, operand 1']
    #allocation5 [shape = 's32[2]{0}', space=sflag, size = 0x8, scoped, tag = 'scoped memory for tpu_custom_call.1']
    #allocation6 [shape = 's32[2]{0}', space=sflag, size = 0x8, scoped, tag = 'scoped memory for tpu_custom_call.1']
    #allocation7 [shape = 'u8[4096]{0}', space=vmem, size = 0x1000, scoped, tag = 'input window, operand 2, single buffered']
    #allocation8 [shape = 's32[1]{0}', space=sflag, size = 0x4, scoped, tag = 'scoped memory for tpu_custom_call.1']
    #allocation9 [shape = 'u8[8192]{0}', space=vmem, size = 0x2000, scoped, tag = 'output window, operand 0']
    %9 = vsyncpa [#allocation5], 0
    %s10 = scalar_lea.sflag [#allocation5], 1
    %11 = vsyncpa %s10, 0
    %12 = vsyncpa [#allocation8], 0
    %13 = vsyncpa [#allocation6], 0
    %s14 = scalar_lea.sflag [#allocation6], 1
    %15 = vsyncpa %s14, 0
    loop: start=0, step=1, limit=4
    $region2: #{tpu_custom_call.1} parent=1 // loop_pre_header
      _
    $region3: #{tpu_custom_call.1} parent=1 // loop_header
      %s17 = sphi 0, %s21
      %p18 = scmp.ge.s32.totalorder %s17, 4
      %s24 = sphi 0, %s36
      %s25 = sphi 0, %s32
      %s26 = sphi 0, %s24
      %s27 = sphi 0, %s25
      %s28 = sphi 0, %s26
      %s29 = sphi 0, %s27
      %s41 = sphi 0, %s43
      %s44 = sphi 0, %s41
      %s45 = sphi 0, %s44
      %s61 = sphi 0, %s45
      %s67 = sphi 0, %s69
      %s70 = sphi 0, %s67
      %s71 = sphi 0, %s70
      %s87 = sphi 0, %s71
      %s95 = sphi 0, %s97
      %s98 = sphi 0, %s95
      %s99 = sphi 0, %s98
      %s115 = sphi 0, %s99
    $region4: #{tpu_custom_call.1} parent=1 // loop_header_branch
      %20 = sbr.rel (%p18) target = $region8
    $region5: #{tpu_custom_call.1} parent=1 // loop_body
      %s22 = ssub.s32 %s17, 1
      %s23 = ssub.s32 %s17, 2
      %s30 = sadd.s32 1, %s25
      %p31 = scmp.ge.s32.totalorder %s30, 1
      %s32 = scalar_select %p31, 0, %s30
      %s33 = sadd.s32 1, %s24
      %s34 = scalar_select %p31, %s33, %s24
      %p35 = scmp.ge.s32.totalorder %s34, 2
      %s36 = scalar_select %p35, 0, %s34
      %s37 = ssub.s32 %s24, %s36
      %s38 = ssub.s32 %s25, %s32
      %s39 = sor.u32 %s37, %s38
      %p40 = scmp.eq.s32.totalorder %s39, 0
      %s42 = sadd.s32 %s41, 1
      %s43 = scalar_select %p40, %s41, %s42
      %p46 = pneg %p40
      %p47 = scmp.eq.s32.totalorder %s17, 1
      %p48 = por %p46, %p47
      %p49 = scmp.ne.s32.totalorder %s41, %s44
      %p50 = scmp.eq.s32.totalorder %s17, 0
      %p51 = por %p49, %p50
      %p52 = scmp.ne.s32.totalorder %s41, %s44
      %p53 = scmp.eq.s32.totalorder %s22, 1
      %p54 = por %p52, %p53
      %p55 = scmp.ne.s32.totalorder %s44, %s45
      %p56 = scmp.eq.s32.totalorder %s22, 0
      %p57 = por %p55, %p56
      %p58 = scmp.ne.s32.totalorder %s44, %s45
      %p59 = scmp.eq.s32.totalorder %s23, 1
      %p60 = por %p58, %p59
      %p62 = scmp.ne.s32.totalorder %s45, %s61
      %p63 = scmp.eq.s32.totalorder %s23, 0
      %p64 = por %p62, %p63
      %s65 = ssub.s32 %s25, %s32
      %p66 = scmp.eq.s32.totalorder %s65, 0
      %s68 = sadd.s32 %s67, 1
      %s69 = scalar_select %p66, %s67, %s68
      %p72 = pneg %p66
      %p73 = scmp.eq.s32.totalorder %s17, 1
      %p74 = por %p72, %p73
      %p75 = scmp.ne.s32.totalorder %s67, %s70
      %p76 = scmp.eq.s32.totalorder %s17, 0
      %p77 = por %p75, %p76
      %p78 = scmp.ne.s32.totalorder %s67, %s70
      %p79 = scmp.eq.s32.totalorder %s22, 1
      %p80 = por %p78, %p79
      %p81 = scmp.ne.s32.totalorder %s70, %s71
      %p82 = scmp.eq.s32.totalorder %s22, 0
      %p83 = por %p81, %p82
      %p84 = scmp.ne.s32.totalorder %s70, %s71
      %p85 = scmp.eq.s32.totalorder %s23, 1
      %p86 = por %p84, %p85
      %p88 = scmp.ne.s32.totalorder %s71, %s87
      %p89 = scmp.eq.s32.totalorder %s23, 0
      %p90 = por %p88, %p89
      %s91 = ssub.s32 %s24, %s36
      %s92 = ssub.s32 %s25, %s32
      %s93 = sor.u32 %s91, %s92
      %p94 = scmp.eq.s32.totalorder %s93, 0
      %s96 = sadd.s32 %s95, 1
      %s97 = scalar_select %p94, %s95, %s96
      %p100 = pneg %p94
      %p101 = scmp.eq.s32.totalorder %s17, 1
      %p102 = por %p100, %p101
      %p103 = scmp.ne.s32.totalorder %s95, %s98
      %p104 = scmp.eq.s32.totalorder %s17, 0
      %p105 = por %p103, %p104
      %p106 = scmp.ne.s32.totalorder %s95, %s98
      %p107 = scmp.eq.s32.totalorder %s22, 1
      %p108 = por %p106, %p107
      %p109 = scmp.ne.s32.totalorder %s98, %s99
      %p110 = scmp.eq.s32.totalorder %s22, 0
      %p111 = por %p109, %p110
      %p112 = scmp.ne.s32.totalorder %s98, %s99
      %p113 = scmp.eq.s32.totalorder %s23, 1
      %p114 = por %p112, %p113
      %p116 = scmp.ne.s32.totalorder %s99, %s115
      %p117 = scmp.eq.s32.totalorder %s23, 0
      %p118 = por %p116, %p117
      %p119 = scmp.le.s32.totalorder 1, %s17
      %p120 = scmp.lt.s32.totalorder %s17, 3
      %p121 = pnand %p119, %p120
      %p122 = pneg %p121
      // Predicated region
      $region9: #{tpu_custom_call.1} parent=5 // pred_check
        _
      $region10: #{tpu_custom_call.1} parent=5 // pred_check_branch
        %124 = sbr.rel (%p121) target = $region12
      $region11: #{tpu_custom_call.1} parent=5 // pred_region
        %s125 = ssub.s32 %s17, 1
        // Predicated region
        $region13: #{tpu_custom_call.1} parent=11 // pred_check
          %p126 = pneg %p83
        $region14: #{tpu_custom_call.1} parent=11 // pred_check_branch
          %128 = sbr.rel (%p126) target = $region16
        $region15: #{tpu_custom_call.1} parent=11 // pred_region
          %s130 = ssub.s32 128, 128
          %131 = vsyncadd [#allocation8], %s130
          %s132 = smul.addr %s27, 128
          %s133 = scalar_lea.hbm %s2, %s132
          %s135 = sshll.u32 [#allocation7], 4
          %s136 = int_to_ptr.vmem [resolvable:$true] %s135
          %138 = dma.hbm_to_vmem [thread:$0]  %s133, 128, %s136, [#allocation8]
        $region16: #{tpu_custom_call.1} parent=11 // pred_fallthru
          _
      $region12: #{tpu_custom_call.1} parent=5 // pred_fallthru
        _
      %p139 = scmp.lt.s32.totalorder %s17, 2
      // Predicated region
      $region17: #{tpu_custom_call.1} parent=5 // pred_check
        %p140 = pneg %p139
      $region18: #{tpu_custom_call.1} parent=5 // pred_check_branch
        %142 = sbr.rel (%p140) target = $region20
      $region19: #{tpu_custom_call.1} parent=5 // pred_region
        // Predicated region
        $region21: #{tpu_custom_call.1} parent=19 // pred_check
          %p143 = pneg %p51
        $region22: #{tpu_custom_call.1} parent=19 // pred_check_branch
          %145 = sbr.rel (%p143) target = $region24
        $region23: #{tpu_custom_call.1} parent=19 // pred_region
          %s146 = sand.u32 %s41, 1
          %s147 = scalar_lea.sflag [#allocation5], %s146
          %s148 = sand.u32 %s41, 1
          %s149 = smul.addr %s148, 8
          %s150 = scalar_lea.vmem [#allocation4], %s149
          %s152 = ssub.s32 128, 128
          %153 = vsyncadd %s147, %s152
          %s154 = sadd.s32 %s25, %s24
          %s155 = smul.addr %s154, 128
          %s156 = scalar_lea.hbm %s1, %s155
          %s158 = sshll.u32 %s150, 4
          %s159 = int_to_ptr.vmem [resolvable:$true] %s158
          %161 = dma.hbm_to_vmem [thread:$0]  %s156, 128, %s159, %s147
        $region24: #{tpu_custom_call.1} parent=19 // pred_fallthru
          _
      $region20: #{tpu_custom_call.1} parent=5 // pred_fallthru
        _
      %p162 = scmp.le.s32.totalorder 1, %s17
      %p163 = scmp.lt.s32.totalorder %s17, 3
      %p164 = pnand %p162, %p163
      %p165 = pneg %p164
      // Predicated region
      $region25: #{tpu_custom_call.1} parent=5 // pred_check
        _
      $region26: #{tpu_custom_call.1} parent=5 // pred_check_branch
        %167 = sbr.rel (%p164) target = $region28
      $region27: #{tpu_custom_call.1} parent=5 // pred_region
        %s168 = ssub.s32 %s17, 1
        %s169 = sand.u32 %s44, 1
        %s170 = scalar_lea.sflag [#allocation5], %s169
        %s171 = sand.u32 %s44, 1
        %s172 = smul.addr %s171, 8
        %s173 = scalar_lea.vmem [#allocation4], %s172
        // Predicated region
        $region29: #{tpu_custom_call.1} parent=27 // pred_check
          %p174 = pneg %p57
        $region30: #{tpu_custom_call.1} parent=27 // pred_check_branch
          %176 = sbr.rel (%p174) target = $region32
        $region31: #{tpu_custom_call.1} parent=27 // pred_region
          %177 = dma.done %s170, 128
        $region32: #{tpu_custom_call.1} parent=27 // pred_fallthru
          _
        // Predicated region
        $region33: #{tpu_custom_call.1} parent=27 // pred_check
          %p178 = pneg %p83
        $region34: #{tpu_custom_call.1} parent=27 // pred_check_branch
          %180 = sbr.rel (%p178) target = $region36
        $region35: #{tpu_custom_call.1} parent=27 // pred_region
          %181 = dma.done [#allocation8], 128
        $region36: #{tpu_custom_call.1} parent=27 // pred_fallthru
          _
        %s182 = sand.u32 %s44, 1
        %s183 = scalar_lea.sflag [#allocation5], %s182
        %s184 = sand.u32 %s44, 1
        %s185 = smul.addr %s184, 8
        %s186 = scalar_lea.vmem [#allocation4], %s185
        %p187 = pneg %p57
        %p188 = pneg %p54
        %p189 = pneg %p83
        %p190 = pneg %p80
        %p191 = pneg %p111
        %p192 = pneg %p108
        %s193 = sand.u32 %s98, 1
        %s194 = scalar_lea.sflag [#allocation6], %s193
        %s195 = sand.u32 %s98, 1
        %s196 = smul.addr %s195, 8
        %s197 = scalar_lea.vmem [#allocation9], %s196
        %v198 = vld [vmem:[%s173] sm:$0xff]
        %v199 = vld [vmem:[#allocation7] sm:$0xff]
        %v200 = vadd.f32 %v198, %v199
        %v201 = vlaneseq
        %v202 = vshrl.u32 %v201, 7
        %v203 = vlaneseq
        %v204 = vand.u32 %v203, 127
        %s205 = smul.u32 %s26, 8
        %s206 = smul.u32 %s27, 8
        %s207 = sadd.s32 %s205, %s206
        %s208 = smul.u32 %s207, 32
        %v209 = vmul.u32 %v202, 32
        %v210 = vstv %s208
        %v211 = vadd.s32 %v210, %v209
        %v212 = vadd.s32 %v211, %v204
        %s213 = sld [smem:[#allocation3]]
        %s214 = smul.u32 %s213, 2654435769
        %v215 = vstv %s214
        %v216 = vxor.u32 %v212, %v215
        %v217 = vshrl.u32 %v216, 16
        %v218 = vxor.u32 %v216, %v217
        %v219 = vmul.u32 %v218, 2146121005
        %v220 = vshrl.u32 %v219, 15
        %v221 = vxor.u32 %v219, %v220
        %v222 = vmul.u32 %v221, 2221713035
        %v223 = vshrl.u32 %v222, 16
        %v224 = vxor.u32 %v222, %v223
        %vm225 = vcmp.ge.u32.totalorder %v224, 429496730
        %v226 = vmul.f32 %v200, 1.1111112
        %v227 = vsel %vm225, %v226, 0.0
        %vm228 = vcmask 261120
        %229 = vst.msk [vmem:[%s197] sm:$0xff] %vm228, %v227
        %s230 = sand.u32 %s98, 1
        %s231 = scalar_lea.sflag [#allocation6], %s230
        %s232 = sand.u32 %s98, 1
        %s233 = smul.addr %s232, 8
        %s234 = scalar_lea.vmem [#allocation9], %s233
        // Predicated region
        $region37: #{tpu_custom_call.1} parent=27 // pred_check
          %p235 = pneg %p108
        $region38: #{tpu_custom_call.1} parent=27 // pred_check_branch
          %237 = sbr.rel (%p235) target = $region40
        $region39: #{tpu_custom_call.1} parent=27 // pred_region
          %s239 = ssub.s32 128, 128
          %240 = vsyncadd %s231, %s239
          %s241 = sadd.s32 %s27, %s26
          %s242 = smul.addr %s241, 128
          %s243 = scalar_lea.hbm %s3, %s242
          %s245 = sshll.u32 %s234, 4
          %s246 = int_to_ptr.vmem [resolvable:$true] %s245
          %248 = dma.vmem_to_hbm [thread:$0]  %s246, 128, %s243, %s231
        $region40: #{tpu_custom_call.1} parent=27 // pred_fallthru
          _
      $region28: #{tpu_custom_call.1} parent=5 // pred_fallthru
        _
      %p249 = scmp.le.s32.totalorder 2, %s17
      // Predicated region
      $region41: #{tpu_custom_call.1} parent=5 // pred_check
        %p250 = pneg %p249
      $region42: #{tpu_custom_call.1} parent=5 // pred_check_branch
        %252 = sbr.rel (%p250) target = $region44
      $region43: #{tpu_custom_call.1} parent=5 // pred_region
        %s253 = ssub.s32 %s17, 2
        // Predicated region
        $region45: #{tpu_custom_call.1} parent=43 // pred_check
          %p254 = pneg %p114
        $region46: #{tpu_custom_call.1} parent=43 // pred_check_branch
          %256 = sbr.rel (%p254) target = $region48
        $region47: #{tpu_custom_call.1} parent=43 // pred_region
          %s257 = sand.u32 %s99, 1
          %s258 = scalar_lea.sflag [#allocation6], %s257
          %s259 = sand.u32 %s99, 1
          %s260 = smul.addr %s259, 8
          %s261 = scalar_lea.vmem [#allocation9], %s260
          %262 = dma.done %s258, 128
        $region48: #{tpu_custom_call.1} parent=43 // pred_fallthru
          _
      $region44: #{tpu_custom_call.1} parent=5 // pred_fallthru
        _
    $region6: #{tpu_custom_call.1} parent=1 // loop_footer
      %s21 = sadd.s32 1, %s17
    $region7: #{tpu_custom_call.1} parent=1 // loop_footer_branch
      %16 = sbr.rel target = $region3
    $region8: #{tpu_custom_call.1} parent=1 // loop_exit
      _
    %263 = vsyncpa [#allocation5], 1
    %s264 = scalar_lea.sflag [#allocation5], 1
    %265 = vsyncpa %s264, 1
    %266 = vsyncpa [#allocation8], 1
    %267 = vsyncpa [#allocation6], 1
    %s268 = scalar_lea.sflag [#allocation6], 1
    %269 = vsyncpa %s268, 1

</llo_original>
